<compile_context>
chip_gen: v7x
topology: tpu7x:2x2x1
jax: 0.10.0
libtpu: 0.0.40
codegen_flags: <defaults>
</compile_context>

<pallas_src>
import numpy as np
import jax
import jax.numpy as jnp
from jax.experimental import pallas as pl
from jax.experimental.pallas import tpu as pltpu


def _make_cfg_kernel(C):
    def kernel(ws_ref, add_ref, x_ref, o_ref):
        # ws_ref : SMEM (B, C*C) f32  fused weight  = W.T * rsqrt(sigma^2 + 1)
        # add_ref: SMEM (B, C)    f32  fused const   = (bias + emb_mix) * scale
        # x_ref  : VMEM (1, C, TILE)   latent tile, native dtype
        # o_ref  : VMEM (1, C, TILE)   CFG-combined output tile, x.dtype
        b = pl.program_id(0)
        x = x_ref[0].astype(jnp.float32)                   # (C, TILE)
        rows = []
        for co in range(C):                                 # unrolled VPU FMAs
            acc = x[0:1, :] * ws_ref[b, co * C + 0]
            for ci in range(1, C):
                acc = acc + x[ci:ci + 1, :] * ws_ref[b, co * C + ci]
            acc = acc + add_ref[b, co]
            rows.append(acc)                                # (1, TILE) each
        o_ref[0] = jnp.concatenate(rows, axis=0).astype(o_ref.dtype)
    return kernel


def _pick_tile_hw(hw, batch, c, in_itemsize, out_itemsize,
                  max_block_bytes=2 << 20):
    """Largest lane-dense tile fitting a VMEM budget; whole HW if it fits."""
    per_elem = c * (in_itemsize + out_itemsize)
    if hw * per_elem <= max_block_bytes:
        tile = hw                                           # whole-slab block
    else:
        budget_elems = max(128, max_block_bytes // per_elem)
        tile = min(hw, (budget_elems // 128) * 128)
        tile = max(tile, 128)
    # Keep >= 2 parallel grid chunks for dual-TensorCore chips (v7x).
    if batch == 1 and tile == hw and hw > 128:
        half = -(-hw // 2)
        cand = max(128, ((half + 127) // 128) * 128)
        if cand < hw:
            tile = cand
    nt = -(-hw // tile)                                     # cdiv
    return tile, nt


def cfg_denoiser(x, sigma, uncond, cond, cond_scale, params):
    B, C, H, W = x.shape
    HW = H * W
    out_dtype = x.dtype
    x_l = x.reshape(B, C, HW)                               # native dtype, free reshape

    # ---- tiny per-batch prework hoisted out of the kernel (O(B*C*D)) ----
    cs = jnp.float32(cond_scale)
    s = jax.lax.rsqrt(sigma.astype(jnp.float32) ** 2 + 1.0)                    # [B]
    pool_mix = ((1.0 - cs) * jnp.mean(uncond.astype(jnp.float32), axis=1)
                + cs * jnp.mean(cond.astype(jnp.float32), axis=1))             # [B, D]
    emb_mix = pool_mix @ params["wc"].astype(jnp.float32)                      # [B, C]
    add = ((params["b"].reshape(1, C).astype(jnp.float32) + emb_mix)
           * s[:, None]).astype(jnp.float32)                                   # [B, C]
    ws = (params["w"].T.astype(jnp.float32)[None, :, :]
          * s[:, None, None])                                                  # [B, C(out), C(in)]
    ws_flat = ws.reshape(B, C * C)

    in_itemsize = jnp.dtype(x.dtype).itemsize
    out_itemsize = jnp.dtype(out_dtype).itemsize
    tile, nt = _pick_tile_hw(HW, B, C, in_itemsize, out_itemsize)
    grid = (B, nt)

    block_bytes = C * tile * (in_itemsize + out_itemsize)
    vmem_limit = int(min(max(4 * block_bytes + (2 << 20), 4 << 20), 32 << 20))

    out_l = pl.pallas_call(
        _make_cfg_kernel(C),
        out_shape=jax.ShapeDtypeStruct((B, C, HW), out_dtype),
        grid=grid,
        in_specs=[
            pl.BlockSpec(memory_space=pltpu.MemorySpace.SMEM),   # ws_flat (B, C*C)
            pl.BlockSpec(memory_space=pltpu.MemorySpace.SMEM),   # add     (B, C)
            pl.BlockSpec((1, C, tile), lambda b, t: (b, 0, t)),  # latent tile
        ],
        out_specs=pl.BlockSpec((1, C, tile), lambda b, t: (b, 0, t)),
        compiler_params=pltpu.CompilerParams(
            dimension_semantics=("parallel", "parallel"),
            vmem_limit_bytes=vmem_limit),
    )(ws_flat, add, x_l)

    return out_l.reshape(B, C, H, W)                        # free reshape back


# ----------------------- pure-JAX reference (NCHW) ------------------------ #
def _inner_model_ref(x, sigma, cond, params):
    w, b, wc = params["w"], params["b"], params["wc"]
    h = jnp.einsum('bihw,io->bohw', x, w) + b.reshape(1, -1, 1, 1)
    emb = jnp.mean(cond, axis=1) @ wc                       # [B, C]
    s = jax.lax.rsqrt(sigma ** 2 + 1.0)
    return (h + emb[:, :, None, None]) * s[:, None, None, None]


def _cfg_ref(x, sigma, uncond, cond, cond_scale, params):
    x_in = jnp.concatenate([x] * 2, axis=0)
    sigma_in = jnp.concatenate([sigma] * 2, axis=0)
    cond_in = jnp.concatenate([uncond, cond], axis=0)
    out = _inner_model_ref(x_in, sigma_in, cond_in, params)
    u, c = jnp.split(out, 2, axis=0)
    return u + (c - u) * cond_scale


if __name__ == "__main__":
    key = jax.random.PRNGKey(0)
    kx, ks, ku, kc, kw, kb, kwc = jax.random.split(key, 7)

    B, C, H, W = 2, 4, 16, 16       # batch, latent channels, spatial
    T, D = 8, 32                    # cond seq len, cond hidden dim
    cond_scale = 7.5

    x = jax.random.normal(kx, (B, C, H, W), jnp.float32)
    sigma = jax.random.uniform(ks, (B,), jnp.float32, 0.1, 10.0)
    uncond = jax.random.normal(ku, (B, T, D), jnp.float32)
    cond = jax.random.normal(kc, (B, T, D), jnp.float32)

    params = {
        "w": jax.random.normal(kw, (C, C), jnp.float32) / np.sqrt(C),
        "b": jax.random.normal(kb, (1, C), jnp.float32) * 0.1,
        "wc": jax.random.normal(kwc, (D, C), jnp.float32) / np.sqrt(D),
    }

    out = jax.block_until_ready(
        cfg_denoiser(x, sigma, uncond, cond, cond_scale, params))
    ref = jax.block_until_ready(
        _cfg_ref(x, sigma, uncond, cond, cond_scale, params))

    np.testing.assert_allclose(np.asarray(out), np.asarray(ref),
                               rtol=1e-3, atol=1e-3)
    print("KERNEL_OK")
</pallas_src>

<mosaic_0001>
module attributes {stable_mosaic.version = 11 : i64} {
  func.func @kernel(%arg0: i32, %arg1: i32, %arg2: memref<2x16xf32, #tpu.memory_space<smem>>, %arg3: memref<2x4xf32, #tpu.memory_space<smem>>, %arg4: memref<1x4x256xf32, #tpu.memory_space<vmem>>, %arg5: memref<1x4x256xf32, #tpu.memory_space<vmem>>) attributes {dimension_semantics = [#tpu.dimension_semantics<parallel>, #tpu.dimension_semantics<parallel>], iteration_bounds = array<i64: 2, 1>, scalar_prefetch = 0 : i64, scratch_operands = 0 : i64, tpu.core_type = #tpu.core_type<tc>, window_params = [{transform_indices = @transform_0, window_bounds = array<i64: 2, 16>}, {transform_indices = @transform_1, window_bounds = array<i64: 2, 4>}, {transform_indices = @transform_2, window_bounds = array<i64: 1, 4, 256>}, {transform_indices = @transform_3, window_bounds = array<i64: 1, 4, 256>}]} {
    %c0 = arith.constant 0 : index
    %c0_0 = arith.constant 0 : index
    %c0_1 = arith.constant 0 : index
    %0 = vector.load %arg4[%c0, %c0_0, %c0_1] : memref<1x4x256xf32, #tpu.memory_space<vmem>>, vector<1x4x256xf32>
    %1 = vector.shape_cast %0 : vector<1x4x256xf32> to vector<4x256xf32>
    %2 = vector.extract_strided_slice %1 {offsets = [0, 0], sizes = [1, 256], strides = [1, 1]} : vector<4x256xf32> to vector<1x256xf32>
    %3 = arith.index_cast %arg0 : i32 to index
    %c0_2 = arith.constant 0 : index
    %4 = memref.load %arg2[%3, %c0_2] : memref<2x16xf32, #tpu.memory_space<smem>>
    %5 = vector.broadcast %4 : f32 to vector<1x256xf32>
    %6 = arith.mulf %2, %5 : vector<1x256xf32>
    %7 = vector.extract_strided_slice %1 {offsets = [1, 0], sizes = [1, 256], strides = [1, 1]} : vector<4x256xf32> to vector<1x256xf32>
    %8 = arith.index_cast %arg0 : i32 to index
    %c1 = arith.constant 1 : index
    %9 = memref.load %arg2[%8, %c1] : memref<2x16xf32, #tpu.memory_space<smem>>
    %10 = vector.broadcast %9 : f32 to vector<1x256xf32>
    %11 = arith.mulf %7, %10 : vector<1x256xf32>
    %12 = arith.addf %6, %11 : vector<1x256xf32>
    %13 = vector.extract_strided_slice %1 {offsets = [2, 0], sizes = [1, 256], strides = [1, 1]} : vector<4x256xf32> to vector<1x256xf32>
    %14 = arith.index_cast %arg0 : i32 to index
    %c2 = arith.constant 2 : index
    %15 = memref.load %arg2[%14, %c2] : memref<2x16xf32, #tpu.memory_space<smem>>
    %16 = vector.broadcast %15 : f32 to vector<1x256xf32>
    %17 = arith.mulf %13, %16 : vector<1x256xf32>
    %18 = arith.addf %12, %17 : vector<1x256xf32>
    %19 = vector.extract_strided_slice %1 {offsets = [3, 0], sizes = [1, 256], strides = [1, 1]} : vector<4x256xf32> to vector<1x256xf32>
    %20 = arith.index_cast %arg0 : i32 to index
    %c3 = arith.constant 3 : index
    %21 = memref.load %arg2[%20, %c3] : memref<2x16xf32, #tpu.memory_space<smem>>
    %22 = vector.broadcast %21 : f32 to vector<1x256xf32>
    %23 = arith.mulf %19, %22 : vector<1x256xf32>
    %24 = arith.addf %18, %23 : vector<1x256xf32>
    %25 = arith.index_cast %arg0 : i32 to index
    %c0_3 = arith.constant 0 : index
    %26 = memref.load %arg3[%25, %c0_3] : memref<2x4xf32, #tpu.memory_space<smem>>
    %27 = vector.broadcast %26 : f32 to vector<1x256xf32>
    %28 = arith.addf %24, %27 : vector<1x256xf32>
    %29 = vector.extract_strided_slice %1 {offsets = [0, 0], sizes = [1, 256], strides = [1, 1]} : vector<4x256xf32> to vector<1x256xf32>
    %30 = arith.index_cast %arg0 : i32 to index
    %c4 = arith.constant 4 : index
    %31 = memref.load %arg2[%30, %c4] : memref<2x16xf32, #tpu.memory_space<smem>>
    %32 = vector.broadcast %31 : f32 to vector<1x256xf32>
    %33 = arith.mulf %29, %32 : vector<1x256xf32>
    %34 = vector.extract_strided_slice %1 {offsets = [1, 0], sizes = [1, 256], strides = [1, 1]} : vector<4x256xf32> to vector<1x256xf32>
    %35 = arith.index_cast %arg0 : i32 to index
    %c5 = arith.constant 5 : index
    %36 = memref.load %arg2[%35, %c5] : memref<2x16xf32, #tpu.memory_space<smem>>
    %37 = vector.broadcast %36 : f32 to vector<1x256xf32>
    %38 = arith.mulf %34, %37 : vector<1x256xf32>
    %39 = arith.addf %33, %38 : vector<1x256xf32>
    %40 = vector.extract_strided_slice %1 {offsets = [2, 0], sizes = [1, 256], strides = [1, 1]} : vector<4x256xf32> to vector<1x256xf32>
    %41 = arith.index_cast %arg0 : i32 to index
    %c6 = arith.constant 6 : index
    %42 = memref.load %arg2[%41, %c6] : memref<2x16xf32, #tpu.memory_space<smem>>
    %43 = vector.broadcast %42 : f32 to vector<1x256xf32>
    %44 = arith.mulf %40, %43 : vector<1x256xf32>
    %45 = arith.addf %39, %44 : vector<1x256xf32>
    %46 = vector.extract_strided_slice %1 {offsets = [3, 0], sizes = [1, 256], strides = [1, 1]} : vector<4x256xf32> to vector<1x256xf32>
    %47 = arith.index_cast %arg0 : i32 to index
    %c7 = arith.constant 7 : index
    %48 = memref.load %arg2[%47, %c7] : memref<2x16xf32, #tpu.memory_space<smem>>
    %49 = vector.broadcast %48 : f32 to vector<1x256xf32>
    %50 = arith.mulf %46, %49 : vector<1x256xf32>
    %51 = arith.addf %45, %50 : vector<1x256xf32>
    %52 = arith.index_cast %arg0 : i32 to index
    %c1_4 = arith.constant 1 : index
    %53 = memref.load %arg3[%52, %c1_4] : memref<2x4xf32, #tpu.memory_space<smem>>
    %54 = vector.broadcast %53 : f32 to vector<1x256xf32>
    %55 = arith.addf %51, %54 : vector<1x256xf32>
    %56 = vector.extract_strided_slice %1 {offsets = [0, 0], sizes = [1, 256], strides = [1, 1]} : vector<4x256xf32> to vector<1x256xf32>
    %57 = arith.index_cast %arg0 : i32 to index
    %c8 = arith.constant 8 : index
    %58 = memref.load %arg2[%57, %c8] : memref<2x16xf32, #tpu.memory_space<smem>>
    %59 = vector.broadcast %58 : f32 to vector<1x256xf32>
    %60 = arith.mulf %56, %59 : vector<1x256xf32>
    %61 = vector.extract_strided_slice %1 {offsets = [1, 0], sizes = [1, 256], strides = [1, 1]} : vector<4x256xf32> to vector<1x256xf32>
    %62 = arith.index_cast %arg0 : i32 to index
    %c9 = arith.constant 9 : index
    %63 = memref.load %arg2[%62, %c9] : memref<2x16xf32, #tpu.memory_space<smem>>
    %64 = vector.broadcast %63 : f32 to vector<1x256xf32>
    %65 = arith.mulf %61, %64 : vector<1x256xf32>
    %66 = arith.addf %60, %65 : vector<1x256xf32>
    %67 = vector.extract_strided_slice %1 {offsets = [2, 0], sizes = [1, 256], strides = [1, 1]} : vector<4x256xf32> to vector<1x256xf32>
    %68 = arith.index_cast %arg0 : i32 to index
    %c10 = arith.constant 10 : index
    %69 = memref.load %arg2[%68, %c10] : memref<2x16xf32, #tpu.memory_space<smem>>
    %70 = vector.broadcast %69 : f32 to vector<1x256xf32>
    %71 = arith.mulf %67, %70 : vector<1x256xf32>
    %72 = arith.addf %66, %71 : vector<1x256xf32>
    %73 = vector.extract_strided_slice %1 {offsets = [3, 0], sizes = [1, 256], strides = [1, 1]} : vector<4x256xf32> to vector<1x256xf32>
    %74 = arith.index_cast %arg0 : i32 to index
    %c11 = arith.constant 11 : index
    %75 = memref.load %arg2[%74, %c11] : memref<2x16xf32, #tpu.memory_space<smem>>
    %76 = vector.broadcast %75 : f32 to vector<1x256xf32>
    %77 = arith.mulf %73, %76 : vector<1x256xf32>
    %78 = arith.addf %72, %77 : vector<1x256xf32>
    %79 = arith.index_cast %arg0 : i32 to index
    %c2_5 = arith.constant 2 : index
    %80 = memref.load %arg3[%79, %c2_5] : memref<2x4xf32, #tpu.memory_space<smem>>
    %81 = vector.broadcast %80 : f32 to vector<1x256xf32>
    %82 = arith.addf %78, %81 : vector<1x256xf32>
    %83 = vector.extract_strided_slice %1 {offsets = [0, 0], sizes = [1, 256], strides = [1, 1]} : vector<4x256xf32> to vector<1x256xf32>
    %84 = arith.index_cast %arg0 : i32 to index
    %c12 = arith.constant 12 : index
    %85 = memref.load %arg2[%84, %c12] : memref<2x16xf32, #tpu.memory_space<smem>>
    %86 = vector.broadcast %85 : f32 to vector<1x256xf32>
    %87 = arith.mulf %83, %86 : vector<1x256xf32>
    %88 = vector.extract_strided_slice %1 {offsets = [1, 0], sizes = [1, 256], strides = [1, 1]} : vector<4x256xf32> to vector<1x256xf32>
    %89 = arith.index_cast %arg0 : i32 to index
    %c13 = arith.constant 13 : index
    %90 = memref.load %arg2[%89, %c13] : memref<2x16xf32, #tpu.memory_space<smem>>
    %91 = vector.broadcast %90 : f32 to vector<1x256xf32>
    %92 = arith.mulf %88, %91 : vector<1x256xf32>
    %93 = arith.addf %87, %92 : vector<1x256xf32>
    %94 = vector.extract_strided_slice %1 {offsets = [2, 0], sizes = [1, 256], strides = [1, 1]} : vector<4x256xf32> to vector<1x256xf32>
    %95 = arith.index_cast %arg0 : i32 to index
    %c14 = arith.constant 14 : index
    %96 = memref.load %arg2[%95, %c14] : memref<2x16xf32, #tpu.memory_space<smem>>
    %97 = vector.broadcast %96 : f32 to vector<1x256xf32>
    %98 = arith.mulf %94, %97 : vector<1x256xf32>
    %99 = arith.addf %93, %98 : vector<1x256xf32>
    %100 = vector.extract_strided_slice %1 {offsets = [3, 0], sizes = [1, 256], strides = [1, 1]} : vector<4x256xf32> to vector<1x256xf32>
    %101 = arith.index_cast %arg0 : i32 to index
    %c15 = arith.constant 15 : index
    %102 = memref.load %arg2[%101, %c15] : memref<2x16xf32, #tpu.memory_space<smem>>
    %103 = vector.broadcast %102 : f32 to vector<1x256xf32>
    %104 = arith.mulf %100, %103 : vector<1x256xf32>
    %105 = arith.addf %99, %104 : vector<1x256xf32>
    %106 = arith.index_cast %arg0 : i32 to index
    %c3_6 = arith.constant 3 : index
    %107 = memref.load %arg3[%106, %c3_6] : memref<2x4xf32, #tpu.memory_space<smem>>
    %108 = vector.broadcast %107 : f32 to vector<1x256xf32>
    %109 = arith.addf %105, %108 : vector<1x256xf32>
    %110 = tpu.concatenate %28, %55, %82, %109 in 0 : vector<1x256xf32>, vector<1x256xf32>, vector<1x256xf32>, vector<1x256xf32> -> vector<4x256xf32>
    %c0_7 = arith.constant 0 : index
    %c0_8 = arith.constant 0 : index
    %c0_9 = arith.constant 0 : index
    %111 = vector.load %arg5[%c0_7, %c0_8, %c0_9] : memref<1x4x256xf32, #tpu.memory_space<vmem>>, vector<1x4x256xf32>
    %112 = vector.shape_cast %111 : vector<1x4x256xf32> to vector<4x256xf32>
    %113 = vector.shape_cast %110 : vector<4x256xf32> to vector<1x4x256xf32>
    tpu.vector_store %arg5[%c0_7, %c0_8, %c0_9], %113 {strides = array<i32>} : memref<1x4x256xf32, #tpu.memory_space<vmem>>, vector<1x4x256xf32>,
    return
  }
  func.func @transform_0(%arg0: i32, %arg1: i32) -> (i32, i32) {
    %c0_i32 = arith.constant 0 : i32
    %c0_i32_0 = arith.constant 0 : i32
    %c0_i32_1 = arith.constant 0 : i32
    return %c0_i32, %c0_i32_0 : i32, i32
  }
  func.func @transform_1(%arg0: i32, %arg1: i32) -> (i32, i32) {
    %c0_i32 = arith.constant 0 : i32
    %c0_i32_0 = arith.constant 0 : i32
    %c0_i32_1 = arith.constant 0 : i32
    return %c0_i32, %c0_i32_0 : i32, i32
  }
  func.func @transform_2(%arg0: i32, %arg1: i32) -> (i32, i32, i32) {
    %c0_i32 = arith.constant 0 : i32
    %c0_i32_0 = arith.constant 0 : i32
    return %arg0, %c0_i32, %arg1 : i32, i32, i32
  }
  func.func @transform_3(%arg0: i32, %arg1: i32) -> (i32, i32, i32) {
    %c0_i32 = arith.constant 0 : i32
    %c0_i32_0 = arith.constant 0 : i32
    return %arg0, %c0_i32, %arg1 : i32, i32, i32
  }
}

</mosaic_0001>

<llo_original>
// kernel: tpu_custom_call.1
$region0: #{tpu_custom_call.1}
  #allocation0 [shape = 'u32[]', space=smem, size = 0x4, offset = 0x4, fixed_abs, tag = 'smem constant byte address 0x4 - core index']
  #allocation1 [shape = 'u32[144,128]{1,0:T(1,128)}', space=vmem, size = 0x12000, scoped, tag = 'internal scratch']
  %s0 = inlined_call_operand.hbm [shape: f32[2,16], index: 0, kind: input, shape index: {}]
  %s1 = inlined_call_operand.vmem [shape: f32[2,4], index: 1, kind: input, shape index: {}]
  %s2 = inlined_call_operand.hbm [shape: f32[2,4,256], index: 2, kind: input, shape index: {}]
  %s3 = inlined_call_operand.hbm [shape: f32[2,4,256], index: 3, kind: output, shape index: {}]
  %s4 = sld [smem:[#allocation0]]
  $region57: #{tpu_custom_call.1} parent=0
    _
  %s6 = ssub.s32 1, %s4
  %s7 = scalar_select 0, %s6, %s4
  $region1: #{tpu_custom_call.1} parent=0
    #allocation2 [shape = 'u8[1024]{0}', space=smem, size = 0x400, scoped, tag = 'input window, operand 0, single buffered']
    #allocation3 [shape = 's32[2]{0}', space=sflag, size = 0x8, scoped, tag = 'scoped memory for tpu_custom_call.1']
    #allocation4 [shape = 's32[2]{0}', space=sflag, size = 0x8, scoped, tag = 'scoped memory for tpu_custom_call.1']
    #allocation5 [shape = 's32[2]{0}', space=sflag, size = 0x8, scoped, tag = 'scoped memory for tpu_custom_call.1']
    #allocation6 [shape = 's32[2]{0}', space=sflag, size = 0x8, scoped, tag = 'scoped memory for tpu_custom_call.1']
    #allocation7 [shape = 'u8[1024]{0}', space=smem, size = 0x400, scoped, tag = 'input window, operand 1, single buffered']
    #allocation8 [shape = 'u8[8192]{0}', space=vmem, size = 0x2000, scoped, tag = 'input window, operand 2']
    #allocation9 [shape = 'u8[8192]{0}', space=vmem, size = 0x2000, scoped, tag = 'output window, operand 0']
    %8 = vsyncpa [#allocation5], 0
    %9 = vsyncpa [#allocation6], 0
    %10 = vsyncpa [#allocation3], 0
    %s11 = scalar_lea.sflag [#allocation3], 1
    %12 = vsyncpa %s11, 0
    %13 = vsyncpa [#allocation4], 0
    %s14 = scalar_lea.sflag [#allocation4], 1
    %15 = vsyncpa %s14, 0
    loop: start=0, step=1, limit=4
    $region2: #{tpu_custom_call.1} parent=1 // loop_pre_header
      _
    $region3: #{tpu_custom_call.1} parent=1 // loop_header
      %s17 = sphi 0, %s21
      %p18 = scmp.ge.s32.totalorder %s17, 4
      %s24 = sphi 0, %s36
      %s25 = sphi 0, %s32
      %s26 = sphi 0, %s24
      %s27 = sphi 0, %s25
      %s28 = sphi 0, %s26
      %s29 = sphi 0, %s27
      %s37 = sphi 0, %s37
      %s39 = sphi 0, %s37
      %s40 = sphi 0, %s39
      %s54 = sphi 0, %s40
      %s58 = sphi 0, %s58
      %s60 = sphi 0, %s58
      %s61 = sphi 0, %s60
      %s75 = sphi 0, %s61
      %s83 = sphi 0, %s85
      %s86 = sphi 0, %s83
      %s87 = sphi 0, %s86
      %s103 = sphi 0, %s87
      %s111 = sphi 0, %s113
      %s114 = sphi 0, %s111
      %s115 = sphi 0, %s114
      %s131 = sphi 0, %s115
    $region4: #{tpu_custom_call.1} parent=1 // loop_header_branch
      %20 = sbr.rel (%p18) target = $region8
    $region5: #{tpu_custom_call.1} parent=1 // loop_body
      %s22 = ssub.s32 %s17, 1
      %s23 = ssub.s32 %s17, 2
      %s30 = sadd.s32 1, %s25
      %p31 = scmp.ge.s32.totalorder %s30, 1
      %s32 = scalar_select %p31, 0, %s30
      %s33 = sadd.s32 1, %s24
      %s34 = scalar_select %p31, %s33, %s24
      %p35 = scmp.ge.s32.totalorder %s34, 2
      %s36 = scalar_select %p35, 0, %s34
      %s38 = sadd.s32 %s37, 1
      %p41 = scmp.eq.s32.totalorder %s17, 1
      %p42 = scmp.ne.s32.totalorder %s37, %s39
      %p43 = scmp.eq.s32.totalorder %s17, 0
      %p44 = por %p42, %p43
      %p45 = scmp.ne.s32.totalorder %s37, %s39
      %p46 = scmp.eq.s32.totalorder %s22, 1
      %p47 = por %p45, %p46
      %p48 = scmp.ne.s32.totalorder %s39, %s40
      %p49 = scmp.eq.s32.totalorder %s22, 0
      %p50 = por %p48, %p49
      %p51 = scmp.ne.s32.totalorder %s39, %s40
      %p52 = scmp.eq.s32.totalorder %s23, 1
      %p53 = por %p51, %p52
      %p55 = scmp.ne.s32.totalorder %s40, %s54
      %p56 = scmp.eq.s32.totalorder %s23, 0
      %p57 = por %p55, %p56
      %s59 = sadd.s32 %s58, 1
      %p62 = scmp.eq.s32.totalorder %s17, 1
      %p63 = scmp.ne.s32.totalorder %s58, %s60
      %p64 = scmp.eq.s32.totalorder %s17, 0
      %p65 = por %p63, %p64
      %p66 = scmp.ne.s32.totalorder %s58, %s60
      %p67 = scmp.eq.s32.totalorder %s22, 1
      %p68 = por %p66, %p67
      %p69 = scmp.ne.s32.totalorder %s60, %s61
      %p70 = scmp.eq.s32.totalorder %s22, 0
      %p71 = por %p69, %p70
      %p72 = scmp.ne.s32.totalorder %s60, %s61
      %p73 = scmp.eq.s32.totalorder %s23, 1
      %p74 = por %p72, %p73
      %p76 = scmp.ne.s32.totalorder %s61, %s75
      %p77 = scmp.eq.s32.totalorder %s23, 0
      %p78 = por %p76, %p77
      %s79 = ssub.s32 %s24, %s36
      %s80 = ssub.s32 %s25, %s32
      %s81 = sor.u32 %s79, %s80
      %p82 = scmp.eq.s32.totalorder %s81, 0
      %s84 = sadd.s32 %s83, 1
      %s85 = scalar_select %p82, %s83, %s84
      %p88 = pneg %p82
      %p89 = scmp.eq.s32.totalorder %s17, 1
      %p90 = por %p88, %p89
      %p91 = scmp.ne.s32.totalorder %s83, %s86
      %p92 = scmp.eq.s32.totalorder %s17, 0
      %p93 = por %p91, %p92
      %p94 = scmp.ne.s32.totalorder %s83, %s86
      %p95 = scmp.eq.s32.totalorder %s22, 1
      %p96 = por %p94, %p95
      %p97 = scmp.ne.s32.totalorder %s86, %s87
      %p98 = scmp.eq.s32.totalorder %s22, 0
      %p99 = por %p97, %p98
      %p100 = scmp.ne.s32.totalorder %s86, %s87
      %p101 = scmp.eq.s32.totalorder %s23, 1
      %p102 = por %p100, %p101
      %p104 = scmp.ne.s32.totalorder %s87, %s103
      %p105 = scmp.eq.s32.totalorder %s23, 0
      %p106 = por %p104, %p105
      %s107 = ssub.s32 %s24, %s36
      %s108 = ssub.s32 %s25, %s32
      %s109 = sor.u32 %s107, %s108
      %p110 = scmp.eq.s32.totalorder %s109, 0
      %s112 = sadd.s32 %s111, 1
      %s113 = scalar_select %p110, %s111, %s112
      %p116 = pneg %p110
      %p117 = scmp.eq.s32.totalorder %s17, 1
      %p118 = por %p116, %p117
      %p119 = scmp.ne.s32.totalorder %s111, %s114
      %p120 = scmp.eq.s32.totalorder %s17, 0
      %p121 = por %p119, %p120
      %p122 = scmp.ne.s32.totalorder %s111, %s114
      %p123 = scmp.eq.s32.totalorder %s22, 1
      %p124 = por %p122, %p123
      %p125 = scmp.ne.s32.totalorder %s114, %s115
      %p126 = scmp.eq.s32.totalorder %s22, 0
      %p127 = por %p125, %p126
      %p128 = scmp.ne.s32.totalorder %s114, %s115
      %p129 = scmp.eq.s32.totalorder %s23, 1
      %p130 = por %p128, %p129
      %p132 = scmp.ne.s32.totalorder %s115, %s131
      %p133 = scmp.eq.s32.totalorder %s23, 0
      %p134 = por %p132, %p133
      %p135 = scmp.le.s32.totalorder 1, %s17
      %p136 = scmp.lt.s32.totalorder %s17, 3
      %p137 = pnand %p135, %p136
      %p138 = pneg %p137
      // Predicated region
      $region9: #{tpu_custom_call.1} parent=5 // pred_check
        _
      $region10: #{tpu_custom_call.1} parent=5 // pred_check_branch
        %140 = sbr.rel (%p137) target = $region12
      $region11: #{tpu_custom_call.1} parent=5 // pred_region
        %s141 = ssub.s32 %s17, 1
        // Predicated region
        $region13: #{tpu_custom_call.1} parent=11 // pred_check
          %p142 = pneg %p50
        $region14: #{tpu_custom_call.1} parent=11 // pred_check_branch
          %144 = sbr.rel (%p142) target = $region16
        $region15: #{tpu_custom_call.1} parent=11 // pred_region
          %s146 = ssub.s32 32, 32
          %147 = vsyncadd [#allocation5], %s146
          %150 = dma.hbm_to_smem %s0, 32, [#allocation2], [#allocation5]
        $region16: #{tpu_custom_call.1} parent=11 // pred_fallthru
          _
        // Predicated region
        $region17: #{tpu_custom_call.1} parent=11 // pred_check
          %p151 = pneg %p71
        $region18: #{tpu_custom_call.1} parent=11 // pred_check_branch
          %153 = sbr.rel (%p151) target = $region20
        $region19: #{tpu_custom_call.1} parent=11 // pred_region
          %s155 = ssub.s32 32, 32
          %156 = vsyncadd [#allocation6], %s155
          %s158 = sshll.u32 %s1, 4
          %s159 = int_to_ptr.vmem [resolvable:$true] %s158
          %161 = dma.vmem_to_smem %s159, 32, [#allocation7], [#allocation6]
        $region20: #{tpu_custom_call.1} parent=11 // pred_fallthru
          _
      $region12: #{tpu_custom_call.1} parent=5 // pred_fallthru
        _
      %p162 = scmp.lt.s32.totalorder %s17, 2
      // Predicated region
      $region21: #{tpu_custom_call.1} parent=5 // pred_check
        %p163 = pneg %p162
      $region22: #{tpu_custom_call.1} parent=5 // pred_check_branch
        %165 = sbr.rel (%p163) target = $region24
      $region23: #{tpu_custom_call.1} parent=5 // pred_region
        // Predicated region
        $region25: #{tpu_custom_call.1} parent=23 // pred_check
          %p166 = pneg %p93
        $region26: #{tpu_custom_call.1} parent=23 // pred_check_branch
          %168 = sbr.rel (%p166) target = $region28
        $region27: #{tpu_custom_call.1} parent=23 // pred_region
          %s169 = sand.u32 %s83, 1
          %s170 = scalar_lea.sflag [#allocation3], %s169
          %s171 = sand.u32 %s83, 1
          %s172 = smul.addr %s171, 8
          %s173 = scalar_lea.vmem [#allocation8], %s172
          %s174 = smul.u32 2, %s25
          %s176 = ssub.s32 128, 128
          %177 = vsyncadd %s170, %s176
          %s178 = smul.addr %s24, 2
          %s179 = sadd.s32 %s174, %s178
          %s180 = smul.addr %s179, 64
          %s181 = scalar_lea.hbm %s2, %s180
          %s183 = sshll.u32 %s173, 4
          %s184 = int_to_ptr.vmem [resolvable:$true] %s183
          %186 = dma.hbm_to_vmem [thread:$0]  %s181, 128, %s184, %s170
        $region28: #{tpu_custom_call.1} parent=23 // pred_fallthru
          _
      $region24: #{tpu_custom_call.1} parent=5 // pred_fallthru
        _
      %p187 = scmp.le.s32.totalorder 1, %s17
      %p188 = scmp.lt.s32.totalorder %s17, 3
      %p189 = pnand %p187, %p188
      %p190 = pneg %p189
      // Predicated region
      $region29: #{tpu_custom_call.1} parent=5 // pred_check
        _
      $region30: #{tpu_custom_call.1} parent=5 // pred_check_branch
        %192 = sbr.rel (%p189) target = $region32
      $region31: #{tpu_custom_call.1} parent=5 // pred_region
        %s193 = ssub.s32 %s17, 1
        // Predicated region
        $region33: #{tpu_custom_call.1} parent=31 // pred_check
          %p194 = pneg %p50
        $region34: #{tpu_custom_call.1} parent=31 // pred_check_branch
          %196 = sbr.rel (%p194) target = $region36
        $region35: #{tpu_custom_call.1} parent=31 // pred_region
          %197 = dma.done [#allocation5], 32
        $region36: #{tpu_custom_call.1} parent=31 // pred_fallthru
          _
        // Predicated region
        $region37: #{tpu_custom_call.1} parent=31 // pred_check
          %p198 = pneg %p71
        $region38: #{tpu_custom_call.1} parent=31 // pred_check_branch
          %200 = sbr.rel (%p198) target = $region40
        $region39: #{tpu_custom_call.1} parent=31 // pred_region
          %201 = dma.done [#allocation6], 32
        $region40: #{tpu_custom_call.1} parent=31 // pred_fallthru
          _
        %s202 = sand.u32 %s86, 1
        %s203 = scalar_lea.sflag [#allocation3], %s202
        %s204 = sand.u32 %s86, 1
        %s205 = smul.addr %s204, 8
        %s206 = scalar_lea.vmem [#allocation8], %s205
        // Predicated region
        $region41: #{tpu_custom_call.1} parent=31 // pred_check
          %p207 = pneg %p99
        $region42: #{tpu_custom_call.1} parent=31 // pred_check_branch
          %209 = sbr.rel (%p207) target = $region44
        $region43: #{tpu_custom_call.1} parent=31 // pred_region
          %210 = dma.done %s203, 128
        $region44: #{tpu_custom_call.1} parent=31 // pred_fallthru
          _
        %211 = sfence
        %p212 = pneg %p50
        %p213 = pneg %p47
        %p214 = pneg %p71
        %p215 = pneg %p68
        %s216 = sand.u32 %s86, 1
        %s217 = scalar_lea.sflag [#allocation3], %s216
        %s218 = sand.u32 %s86, 1
        %s219 = smul.addr %s218, 8
        %s220 = scalar_lea.vmem [#allocation8], %s219
        %p221 = pneg %p99
        %p222 = pneg %p96
        %p223 = pneg %p127
        %p224 = pneg %p124
        %s225 = sand.u32 %s114, 1
        %s226 = scalar_lea.sflag [#allocation4], %s225
        %s227 = sand.u32 %s114, 1
        %s228 = smul.addr %s227, 8
        %s229 = scalar_lea.vmem [#allocation9], %s228
        %s230 = smul.u32 2, %s27
        %s231 = smul.u32 2, %s27
        %v232 = vld [vmem:[%s206] sm:$0xff]
        %s233 = smul.u32 %s26, 128
        %s234 = sld [smem:[#allocation2 + %s233]]
        %v235 = vstv %s234
        %v236 = vmul.f32 %v232, %v235
        %s237 = sadd.s32 %s233, 1
        %s238 = sld [smem:[#allocation2 + %s237]]
        %v239 = vstv %s238
        %v240 = vmul.f32 %v232, %v239
        %v242 = vrot.slane %v240, 5
        %v243 = vrot.slane %v242, 4
        %v245 = vadd.f32 %v236, %v243
        %s246 = sadd.s32 %s233, 2
        %s247 = sld [smem:[#allocation2 + %s246]]
        %v248 = vstv %s247
        %v249 = vmul.f32 %v232, %v248
        %v251 = vrot.slane %v249, 6
        %v252 = vrot.slane %v251, 4
        %v254 = vadd.f32 %v245, %v252
        %s255 = sadd.s32 %s233, 3
        %s256 = sld [smem:[#allocation2 + %s255]]
        %v257 = vstv %s256
        %v258 = vmul.f32 %v232, %v257
        %v260 = vrot.slane %v258, 7
        %v261 = vrot.slane %v260, 4
        %v263 = vadd.f32 %v254, %v261
        %s264 = sld [smem:[#allocation7 + %s233]]
        %v265 = vstv %s264
        %v266 = vadd.f32 %v263, %v265
        %s267 = sadd.s32 %s233, 4
        %s268 = sld [smem:[#allocation2 + %s267]]
        %v269 = vstv %s268
        %v270 = vmul.f32 %v232, %v269
        %s271 = sadd.s32 %s233, 5
        %s272 = sld [smem:[#allocation2 + %s271]]
        %v273 = vstv %s272
        %v274 = vmul.f32 %v232, %v273
        %v276 = vrot.slane %v274, 5
        %v277 = vrot.slane %v276, 4
        %v279 = vadd.f32 %v270, %v277
        %s280 = sadd.s32 %s233, 6
        %s281 = sld [smem:[#allocation2 + %s280]]
        %v282 = vstv %s281
        %v283 = vmul.f32 %v232, %v282
        %v285 = vrot.slane %v283, 6
        %v286 = vrot.slane %v285, 4
        %v288 = vadd.f32 %v279, %v286
        %s289 = sadd.s32 %s233, 7
        %s290 = sld [smem:[#allocation2 + %s289]]
        %v291 = vstv %s290
        %v292 = vmul.f32 %v232, %v291
        %v294 = vrot.slane %v292, 7
        %v295 = vrot.slane %v294, 4
        %v297 = vadd.f32 %v288, %v295
        %s298 = sld [smem:[#allocation7 + %s237]]
        %v299 = vstv %s298
        %v300 = vadd.f32 %v297, %v299
        %s301 = sadd.s32 %s233, 8
        %s302 = sld [smem:[#allocation2 + %s301]]
        %v303 = vstv %s302
        %v304 = vmul.f32 %v232, %v303
        %s305 = sadd.s32 %s233, 9
        %s306 = sld [smem:[#allocation2 + %s305]]
        %v307 = vstv %s306
        %v308 = vmul.f32 %v232, %v307
        %v310 = vrot.slane %v308, 5
        %v311 = vrot.slane %v310, 4
        %v313 = vadd.f32 %v304, %v311
        %s314 = sadd.s32 %s233, 10
        %s315 = sld [smem:[#allocation2 + %s314]]
        %v316 = vstv %s315
        %v317 = vmul.f32 %v232, %v316
        %v319 = vrot.slane %v317, 6
        %v320 = vrot.slane %v319, 4
        %v322 = vadd.f32 %v313, %v320
        %s323 = sadd.s32 %s233, 11
        %s324 = sld [smem:[#allocation2 + %s323]]
        %v325 = vstv %s324
        %v326 = vmul.f32 %v232, %v325
        %v328 = vrot.slane %v326, 7
        %v329 = vrot.slane %v328, 4
        %v331 = vadd.f32 %v322, %v329
        %s332 = sld [smem:[#allocation7 + %s246]]
        %v333 = vstv %s332
        %v334 = vadd.f32 %v331, %v333
        %s335 = sadd.s32 %s233, 12
        %s336 = sld [smem:[#allocation2 + %s335]]
        %v337 = vstv %s336
        %v338 = vmul.f32 %v232, %v337
        %s339 = sadd.s32 %s233, 13
        %s340 = sld [smem:[#allocation2 + %s339]]
        %v341 = vstv %s340
        %v342 = vmul.f32 %v232, %v341
        %v344 = vrot.slane %v342, 5
        %v345 = vrot.slane %v344, 4
        %v347 = vadd.f32 %v338, %v345
        %s348 = sadd.s32 %s233, 14
        %s349 = sld [smem:[#allocation2 + %s348]]
        %v350 = vstv %s349
        %v351 = vmul.f32 %v232, %v350
        %v353 = vrot.slane %v351, 6
        %v354 = vrot.slane %v353, 4
        %v356 = vadd.f32 %v347, %v354
        %s357 = sadd.s32 %s233, 15
        %s358 = sld [smem:[#allocation2 + %s357]]
        %v359 = vstv %s358
        %v360 = vmul.f32 %v232, %v359
        %v362 = vrot.slane %v360, 7
        %v363 = vrot.slane %v362, 4
        %v365 = vadd.f32 %v356, %v363
        %s366 = sld [smem:[#allocation7 + %s255]]
        %v367 = vstv %s366
        %v368 = vadd.f32 %v365, %v367
        %v370 = vlaneseq
        %v371 = vshrl.u32 %v370, 7
        %v372 = vsub.s32 0, %v371
        %v373 = vrot.slane %v266, %v372
        %v374 = vlaneseq
        %v375 = vshrl.u32 %v374, 7
        %v376 = vsub.s32 4, %v375
        %v377 = vrot.slane %v266, %v376
        %v381 = vlaneseq
        %v382 = vshrl.u32 %v381, 7
        %v383 = vsub.s32 0, %v382
        %v384 = vrot.slane %v300, %v383
        %v385 = vlaneseq
        %v386 = vshrl.u32 %v385, 7
        %v387 = vsub.s32 4, %v386
        %v388 = vrot.slane %v300, %v387
        %v392 = vlaneseq
        %v393 = vshrl.u32 %v392, 7
        %v394 = vsub.s32 0, %v393
        %v395 = vrot.slane %v334, %v394
        %v396 = vlaneseq
        %v397 = vshrl.u32 %v396, 7
        %v398 = vsub.s32 4, %v397
        %v399 = vrot.slane %v334, %v398
        %v403 = vlaneseq
        %v404 = vshrl.u32 %v403, 7
        %v405 = vsub.s32 0, %v404
        %v406 = vrot.slane %v368, %v405
        %v407 = vlaneseq
        %v408 = vshrl.u32 %v407, 7
        %v409 = vsub.s32 4, %v408
        %v410 = vrot.slane %v368, %v409
        %vm413 = vcmask 1040384
        %v414 = vsel %vm413, %v373, %v384
        %v415 = vsel %vm413, %v377, %v388
        %vm416 = vcmask 1041408
        %v417 = vsel %vm416, %v414, %v395
        %v418 = vsel %vm416, %v415, %v399
        %vm419 = vcmask 1042432
        %v420 = vsel %vm419, %v417, %v406
        %v421 = vsel %vm419, %v418, %v410
        %v424 = vcombine.low %v420, %v421
        %426 = vst [vmem:[%s229] sm:$0xff] %v424
        %s427 = sand.u32 %s114, 1
        %s428 = scalar_lea.sflag [#allocation4], %s427
        %s429 = sand.u32 %s114, 1
        %s430 = smul.addr %s429, 8
        %s431 = scalar_lea.vmem [#allocation9], %s430
        // Predicated region
        $region45: #{tpu_custom_call.1} parent=31 // pred_check
          %p432 = pneg %p124
        $region46: #{tpu_custom_call.1} parent=31 // pred_check_branch
          %434 = sbr.rel (%p432) target = $region48
        $region47: #{tpu_custom_call.1} parent=31 // pred_region
          %s435 = smul.u32 2, %s27
          %s437 = ssub.s32 128, 128
          %438 = vsyncadd %s428, %s437
          %s439 = smul.addr %s26, 2
          %s440 = sadd.s32 %s435, %s439
          %s441 = smul.addr %s440, 64
          %s442 = scalar_lea.hbm %s3, %s441
          %s444 = sshll.u32 %s431, 4
          %s445 = int_to_ptr.vmem [resolvable:$true] %s444
          %447 = dma.vmem_to_hbm [thread:$0]  %s445, 128, %s442, %s428
        $region48: #{tpu_custom_call.1} parent=31 // pred_fallthru
          _
      $region32: #{tpu_custom_call.1} parent=5 // pred_fallthru
        _
      %p448 = scmp.le.s32.totalorder 2, %s17
      // Predicated region
      $region49: #{tpu_custom_call.1} parent=5 // pred_check
        %p449 = pneg %p448
      $region50: #{tpu_custom_call.1} parent=5 // pred_check_branch
        %451 = sbr.rel (%p449) target = $region52
      $region51: #{tpu_custom_call.1} parent=5 // pred_region
        %s452 = ssub.s32 %s17, 2
        // Predicated region
        $region53: #{tpu_custom_call.1} parent=51 // pred_check
          %p453 = pneg %p130
        $region54: #{tpu_custom_call.1} parent=51 // pred_check_branch
          %455 = sbr.rel (%p453) target = $region56
        $region55: #{tpu_custom_call.1} parent=51 // pred_region
          %s456 = sand.u32 %s115, 1
          %s457 = scalar_lea.sflag [#allocation4], %s456
          %s458 = sand.u32 %s115, 1
          %s459 = smul.addr %s458, 8
          %s460 = scalar_lea.vmem [#allocation9], %s459
          %461 = dma.done %s457, 128
        $region56: #{tpu_custom_call.1} parent=51 // pred_fallthru
          _
      $region52: #{tpu_custom_call.1} parent=5 // pred_fallthru
        _
    $region6: #{tpu_custom_call.1} parent=1 // loop_footer
      %s21 = sadd.s32 1, %s17
    $region7: #{tpu_custom_call.1} parent=1 // loop_footer_branch
      %16 = sbr.rel target = $region3
    $region8: #{tpu_custom_call.1} parent=1 // loop_exit
      _
    %462 = vsyncpa [#allocation3], 1
    %s463 = scalar_lea.sflag [#allocation3], 1
    %464 = vsyncpa %s463, 1
    %465 = vsyncpa [#allocation4], 1
    %s466 = scalar_lea.sflag [#allocation4], 1
    %467 = vsyncpa %s466, 1
    %468 = vsyncpa [#allocation5], 1
    %s469 = scalar_lea.sflag [#allocation5], 1
    %470 = vsyncpa %s469, 1
    %471 = vsyncpa [#allocation6], 1
    %s472 = scalar_lea.sflag [#allocation6], 1
    %473 = vsyncpa %s472, 1

</llo_original>
